<compile_context>
chip_gen: v7x
topology: tpu7x:2x2x1
jax: 0.10.0
libtpu: 0.0.40
codegen_flags: <defaults>
</compile_context>

<pallas_src>
import math

import jax
import jax.numpy as jnp
from jax.experimental import pallas as pl
from jax.experimental.pallas import tpu as pltpu


def _round_up(x: int, m: int) -> int:
    return (x + m - 1) // m * m


def _vmem_limit_bytes() -> int:
    """Generation-aware VMEM request: ~80% of physical, conservative fallback."""
    try:
        cap = pltpu.get_tpu_info().vmem_capacity_bytes
        return int(cap * 0.8)          # ~51 MiB on v7x, ~102 MiB on v5e/v6e
    except Exception:                   # pragma: no cover - info query unavailable
        return 48 * 1024 * 1024


# ----------------------------- Pallas kernel --------------------------------

def make_gcnii_kernel(n_layers: int, alpha: float):
    """Kernel closure with static layer count / alpha.

    Grid: (n_layers,) marked "arbitrary".  The bf16 hidden state h lives in a
    VMEM scratch carried across grid steps; the adjacency is DMA'd once into a
    single VMEM scratch at l == 0; the per-layer folded weight beta_l * W_l is
    the only array whose block changes with the grid index (streamed, double-
    buffered, overlapped with compute).
    """

    def kernel(omb_ref, adj_hbm, h0_ref, wconv_ref, w1_ref, b1_ref,
               out_ref, adj_vmem, h_ref, dma_sem):
        l = pl.program_id(0)

        # ---- first grid step: one-time adj DMA + h scratch init ------------
        @pl.when(l == 0)
        def _():
            cp = pltpu.make_async_copy(adj_hbm, adj_vmem, dma_sem)
            cp.start()
            h_ref[...] = h0_ref[...].astype(jnp.bfloat16)       # h = h0
            cp.wait()

        # ---- GCNII layer l ---------------------------------------------------
        #   t     = (1-alpha) * A_hat @ h + alpha * h0            (f32 accum)
        #   h_new = relu( beta_l * (t @ W_l) + (1-beta_l) * t )   (residual f32)
        # (1-alpha) folded into adj in the wrapper; beta_l folded into W_l.
        one_minus_beta = omb_ref[l]                               # SMEM scalar
        t = jnp.dot(adj_vmem[...], h_ref[...],                    # bf16 MXU
                    preferred_element_type=jnp.float32)
        t = t + alpha * h0_ref[...]                               # f32 VPU
        h_new = jnp.dot(t.astype(jnp.bfloat16), wconv_ref[...],   # bf16 MXU
                        preferred_element_type=jnp.float32)
        h_new = jnp.maximum(h_new + one_minus_beta * t, 0.0)      # f32 VPU
        h_ref[...] = h_new.astype(jnp.bfloat16)

        # ---- last grid step: fc1 (logits), lane-dense store ------------------
        @pl.when(l == n_layers - 1)
        def _():
            logits = jnp.dot(h_new.astype(jnp.bfloat16), w1_ref[...],
                             preferred_element_type=jnp.float32)
            out_ref[...] = logits + b1_ref[...]

    return kernel


def gcnii_forward(adj_norm, x, w0, b0, wconv, w1, b1, *, alpha, lamda):
    """Folds / pads operands in the wrapper, runs the fused kernel, slices back."""
    n_layers = wconv.shape[0]
    n_nodes, _ = x.shape
    n_hidden = w0.shape[1]
    n_classes = w1.shape[1]

    # lane-dense padded sizes
    N = _round_up(n_nodes, 128)
    H = _round_up(n_hidden, 128)
    C = _round_up(n_classes, 128)

    # ---- fc0 in the wrapper (plain XLA): h0 = relu(x @ w0 + b0), zero-padded.
    h0 = jnp.maximum(x @ w0 + b0, 0.0).astype(jnp.float32)
    h0_p = jnp.pad(h0, ((0, N - n_nodes), (0, H - n_hidden)))

    # ---- fold + pad in target bf16 dtype (no padded f32 temps) --------------
    adj_p = jnp.pad(((1.0 - alpha) * adj_norm).astype(jnp.bfloat16),
                    ((0, N - n_nodes), (0, N - n_nodes)))          # A' = (1-a)A_hat

    betas = jnp.array([math.log(lamda / (i + 1) + 1.0) for i in range(n_layers)],
                      jnp.float32)
    wconv_p = jnp.pad((betas[:, None, None] * wconv).astype(jnp.bfloat16),
                      ((0, 0), (0, H - n_hidden), (0, H - n_hidden)))  # beta_l*W_l
    one_minus_beta = (1.0 - betas).astype(jnp.float32)              # SMEM scalars

    w1_p = jnp.pad(w1.astype(jnp.bfloat16),
                   ((0, H - n_hidden), (0, C - n_classes)))
    b1_p = jnp.pad(b1.astype(jnp.float32), ((0, 0), (0, C - n_classes)))

    kernel = make_gcnii_kernel(n_layers, alpha)

    out_p = pl.pallas_call(
        kernel,
        out_shape=jax.ShapeDtypeStruct((N, C), jnp.float32),
        grid_spec=pltpu.PrefetchScalarGridSpec(
            num_scalar_prefetch=0,
            grid=(n_layers,),
            in_specs=[
                pl.BlockSpec(memory_space=pltpu.MemorySpace.SMEM),        # 1-beta_l
                pl.BlockSpec(memory_space=pl.ANY),                        # A' (HBM)
                pl.BlockSpec((N, H), lambda l: (0, 0)),                   # h0 (f32)
                pl.BlockSpec((pl.Squeezed(), H, H), lambda l: (l, 0, 0)), # beta_l*W_l
                pl.BlockSpec((H, C), lambda l: (0, 0)),                   # w1
                pl.BlockSpec((1, C), lambda l: (0, 0)),                   # b1
            ],
            out_specs=pl.BlockSpec((N, C), lambda l: (0, 0)),             # resident out
            scratch_shapes=[
                pltpu.VMEM((N, N), jnp.bfloat16),   # adj, single VMEM copy
                pltpu.VMEM((N, H), jnp.bfloat16),   # carried h (bf16)
                pltpu.SemaphoreType.DMA,            # adj copy semaphore
            ],
        ),
        compiler_params=pltpu.CompilerParams(
            dimension_semantics=("arbitrary",),
            vmem_limit_bytes=_vmem_limit_bytes(),
        ),
    )(one_minus_beta, adj_p, h0_p, wconv_p, w1_p, b1_p)

    return out_p[:n_nodes, :n_classes]


# ------------------------------ glue (plain JAX) -----------------------------

def build_norm_adj(edge_index, n_nodes):
    """Dense symmetrically-normalized adjacency with self loops:
       A_hat = D^{-1/2} (A + I) D^{-1/2}."""
    src, dst = edge_index
    a = jnp.zeros((n_nodes, n_nodes), jnp.float32)
    a = a.at[src, dst].set(1.0)
    a = a.at[dst, src].set(1.0)           # symmetrize
    a = a + jnp.eye(n_nodes, dtype=jnp.float32)
    a = jnp.minimum(a, 1.0)               # clamp duplicates / self loops
    deg = a.sum(axis=1)
    d_inv_sqrt = 1.0 / jnp.sqrt(jnp.maximum(deg, 1e-12))
    return a * d_inv_sqrt[:, None] * d_inv_sqrt[None, :]


def init_params(key, in_feats, n_hidden, n_classes, n_layers):
    """Deterministic synthetic parameter init (shapes match the PyTorch module,
    Linear weights stored transposed as (in_dim, out_dim))."""
    keys = jax.random.split(key, 3 + n_layers)
    w0 = jax.random.normal(keys[0], (in_feats, n_hidden), jnp.float32) * 0.1
    b0 = jax.random.normal(keys[1], (1, n_hidden), jnp.float32) * 0.01
    wconv = jnp.stack([
        jax.random.normal(keys[3 + i], (n_hidden, n_hidden), jnp.float32) * 0.1
        for i in range(n_layers)
    ])
    kw1, kb1 = jax.random.split(keys[2])
    w1 = jax.random.normal(kw1, (n_hidden, n_classes), jnp.float32) * 0.1
    b1 = jax.random.normal(kb1, (1, n_classes), jnp.float32) * 0.01
    return w0, b0, wconv, w1, b1


def reference_forward(adj, x, w0, b0, wconv, w1, b1, *, alpha, lamda):
    """Pure-JAX f32 reference mirroring the PyTorch forward (dropout=identity)."""
    h = jnp.maximum(x @ w0 + b0, 0.0)
    h0 = h
    for i in range(wconv.shape[0]):
        beta = math.log(lamda / (i + 1) + 1.0)
        hi = adj @ h
        support = (1.0 - alpha) * hi + alpha * h0
        h = jnp.maximum(beta * (support @ wconv[i]) + (1.0 - beta) * support, 0.0)
    return h @ w1 + b1


# --------------------------------- main --------------------------------------

if __name__ == "__main__":
    # small deterministic problem (padded to lane-dense sizes inside the wrapper)
    N_NODES, IN_FEATS, N_HIDDEN, N_CLASSES, N_LAYERS = 64, 16, 32, 8, 3
    ALPHA, LAMDA = 0.1, 0.5

    key = jax.random.PRNGKey(0)
    k_feat, k_edge, k_param = jax.random.split(key, 3)

    # synthetic graph: 256 random directed edges over 64 nodes
    n_edges = 256
    edge_index = jax.random.randint(k_edge, (2, n_edges), 0, N_NODES)
    adj = build_norm_adj(edge_index, N_NODES)                    # (N, N)

    features = jax.random.normal(k_feat, (N_NODES, IN_FEATS), jnp.float32)
    w0, b0, wconv, w1, b1 = init_params(
        k_param, IN_FEATS, N_HIDDEN, N_CLASSES, N_LAYERS)

    out = gcnii_forward(adj, features, w0, b0, wconv, w1, b1,
                        alpha=ALPHA, lamda=LAMDA)
    out = jax.block_until_ready(out)

    ref = reference_forward(adj, features, w0, b0, wconv, w1, b1,
                            alpha=ALPHA, lamda=LAMDA)
    assert out.shape == (N_NODES, N_CLASSES)
    # bf16 MXU operands (f32 accumulation / f32 residual path) -> relaxed tol
    assert jnp.allclose(out, ref, atol=3e-2, rtol=3e-2), "mismatch vs reference"

    print("KERNEL_OK")
</pallas_src>

<mosaic_0001>
module attributes {stable_mosaic.version = 11 : i64} {
  func.func @kernel(%arg0: i32, %arg1: memref<3xf32, #tpu.memory_space<smem>>, %arg2: memref<128x128xbf16, #tpu.memory_space<any>>, %arg3: memref<128x128xf32, #tpu.memory_space<vmem>>, %arg4: memref<1x128x128xbf16, #tpu.memory_space<vmem>>, %arg5: memref<128x128xbf16, #tpu.memory_space<vmem>>, %arg6: memref<1x128xf32, #tpu.memory_space<vmem>>, %arg7: memref<128x128xf32, #tpu.memory_space<vmem>>, %arg8: memref<128x128xbf16, #tpu.memory_space<vmem>>, %arg9: memref<128x128xbf16, #tpu.memory_space<vmem>>, %arg10: memref<!tpu.dma_semaphore, #tpu.memory_space<semaphore_mem>>) attributes {dimension_semantics = [#tpu.dimension_semantics<arbitrary>], iteration_bounds = array<i64: 3>, scalar_prefetch = 0 : i64, scratch_operands = 3 : i64, tpu.core_type = #tpu.core_type<tc>, window_params = [{transform_indices = @transform_0, window_bounds = array<i64: 3>}, {}, {pipeline_mode = #tpu.pipeline_mode<synchronous>, transform_indices = @transform_2, window_bounds = array<i64: 128, 128>}, {transform_indices = @transform_3, window_bounds = array<i64: 1, 128, 128>}, {pipeline_mode = #tpu.pipeline_mode<synchronous>, transform_indices = @transform_4, window_bounds = array<i64: 128, 128>}, {pipeline_mode = #tpu.pipeline_mode<synchronous>, transform_indices = @transform_5, window_bounds = array<i64: 1, 128>}, {pipeline_mode = #tpu.pipeline_mode<synchronous>, transform_indices = @transform_6, window_bounds = array<i64: 128, 128>}]} {
    %c0_i32 = arith.constant 0 : i32
    %0 = arith.cmpi eq, %arg0, %c0_i32 : i32
    %1 = arith.extui %0 : i1 to i32
    %c0_i32_0 = arith.constant 0 : i32
    %2 = arith.cmpi ne, %1, %c0_i32_0 : i32
    scf.if %2 {
      tpu.enqueue_dma source(%arg2 : memref<128x128xbf16, #tpu.memory_space<any>>) target(%arg8 : memref<128x128xbf16, #tpu.memory_space<vmem>>) target_semaphore(%arg10 : memref<!tpu.dma_semaphore, #tpu.memory_space<semaphore_mem>>)
      %c0_15 = arith.constant 0 : index
      %c0_16 = arith.constant 0 : index
      %26 = vector.load %arg3[%c0_15, %c0_16] : memref<128x128xf32, #tpu.memory_space<vmem>>, vector<128x128xf32>
      %27 = arith.truncf %26 : vector<128x128xf32> to vector<128x128xbf16>
      %c0_17 = arith.constant 0 : index
      %c0_18 = arith.constant 0 : index
      %28 = vector.load %arg9[%c0_17, %c0_18] : memref<128x128xbf16, #tpu.memory_space<vmem>>, vector<128x128xbf16>
      tpu.vector_store %arg9[%c0_17, %c0_18], %27 {strides = array<i32>} : memref<128x128xbf16, #tpu.memory_space<vmem>>, vector<128x128xbf16>,
      tpu.wait_dma2 semaphore(%arg10 : memref<!tpu.dma_semaphore, #tpu.memory_space<semaphore_mem>>) src(%arg2 : memref<128x128xbf16, #tpu.memory_space<any>>) dst(%arg8 : memref<128x128xbf16, #tpu.memory_space<vmem>>)
    } else {
    }
    %3 = arith.index_cast %arg0 : i32 to index
    %4 = memref.load %arg1[%3] : memref<3xf32, #tpu.memory_space<smem>>
    %c0 = arith.constant 0 : index
    %c0_1 = arith.constant 0 : index
    %5 = vector.load %arg8[%c0, %c0_1] : memref<128x128xbf16, #tpu.memory_space<vmem>>, vector<128x128xbf16>
    %c0_2 = arith.constant 0 : index
    %c0_3 = arith.constant 0 : index
    %6 = vector.load %arg9[%c0_2, %c0_3] : memref<128x128xbf16, #tpu.memory_space<vmem>>, vector<128x128xbf16>
    %cst = arith.constant dense<0.000000e+00> : vector<128x128xf32>
    %7 = tpu.matmul %5, %6, %cst {dimension_numbers = #tpu.dot_dimension_numbers<[1], [0], [0], [1], [0, 0, 1, 1], [], []>} : vector<128x128xbf16>, vector<128x128xbf16>, vector<128x128xf32> -> vector<128x128xf32>
    %c0_4 = arith.constant 0 : index
    %c0_5 = arith.constant 0 : index
    %8 = vector.load %arg3[%c0_4, %c0_5] : memref<128x128xf32, #tpu.memory_space<vmem>>, vector<128x128xf32>
    %cst_6 = arith.constant 1.000000e-01 : f32
    %9 = vector.broadcast %cst_6 : f32 to vector<128x128xf32>
    %10 = arith.mulf %9, %8 : vector<128x128xf32>
    %11 = arith.addf %7, %10 : vector<128x128xf32>
    %12 = arith.truncf %11 : vector<128x128xf32> to vector<128x128xbf16>
    %c0_7 = arith.constant 0 : index
    %c0_8 = arith.constant 0 : index
    %c0_9 = arith.constant 0 : index
    %13 = vector.load %arg4[%c0_7, %c0_8, %c0_9] : memref<1x128x128xbf16, #tpu.memory_space<vmem>>, vector<1x128x128xbf16>
    %14 = vector.shape_cast %13 : vector<1x128x128xbf16> to vector<128x128xbf16>
    %cst_10 = arith.constant dense<0.000000e+00> : vector<128x128xf32>
    %15 = tpu.matmul %12, %14, %cst_10 {dimension_numbers = #tpu.dot_dimension_numbers<[1], [0], [0], [1], [0, 0, 1, 1], [], []>} : vector<128x128xbf16>, vector<128x128xbf16>, vector<128x128xf32> -> vector<128x128xf32>
    %16 = vector.broadcast %4 : f32 to vector<128x128xf32>
    %17 = arith.mulf %16, %11 : vector<128x128xf32>
    %18 = arith.addf %15, %17 : vector<128x128xf32>
    %cst_11 = arith.constant 0.000000e+00 : f32
    %19 = vector.broadcast %cst_11 : f32 to vector<128x128xf32>
    %20 = arith.maximumf %18, %19 : vector<128x128xf32>
    %21 = arith.truncf %20 : vector<128x128xf32> to vector<128x128xbf16>
    %c0_12 = arith.constant 0 : index
    %c0_13 = arith.constant 0 : index
    %22 = vector.load %arg9[%c0_12, %c0_13] : memref<128x128xbf16, #tpu.memory_space<vmem>>, vector<128x128xbf16>
    tpu.vector_store %arg9[%c0_12, %c0_13], %21 {strides = array<i32>} : memref<128x128xbf16, #tpu.memory_space<vmem>>, vector<128x128xbf16>,
    %c2_i32 = arith.constant 2 : i32
    %23 = arith.cmpi eq, %arg0, %c2_i32 : i32
    %24 = arith.extui %23 : i1 to i32
    %c0_i32_14 = arith.constant 0 : i32
    %25 = arith.cmpi ne, %24, %c0_i32_14 : i32
    scf.if %25 {
      %26 = arith.truncf %20 : vector<128x128xf32> to vector<128x128xbf16>
      %c0_15 = arith.constant 0 : index
      %c0_16 = arith.constant 0 : index
      %27 = vector.load %arg5[%c0_15, %c0_16] : memref<128x128xbf16, #tpu.memory_space<vmem>>, vector<128x128xbf16>
      %cst_17 = arith.constant dense<0.000000e+00> : vector<128x128xf32>
      %28 = tpu.matmul %26, %27, %cst_17 {dimension_numbers = #tpu.dot_dimension_numbers<[1], [0], [0], [1], [0, 0, 1, 1], [], []>} : vector<128x128xbf16>, vector<128x128xbf16>, vector<128x128xf32> -> vector<128x128xf32>
      %c0_18 = arith.constant 0 : index
      %c0_19 = arith.constant 0 : index
      %29 = vector.load %arg6[%c0_18, %c0_19] : memref<1x128xf32, #tpu.memory_space<vmem>>, vector<1x128xf32>
      %30 = vector.broadcast %29 : vector<1x128xf32> to vector<128x128xf32>
      %31 = arith.addf %28, %30 : vector<128x128xf32>
      %c0_20 = arith.constant 0 : index
      %c0_21 = arith.constant 0 : index
      %32 = vector.load %arg7[%c0_20, %c0_21] : memref<128x128xf32, #tpu.memory_space<vmem>>, vector<128x128xf32>
      tpu.vector_store %arg7[%c0_20, %c0_21], %31 {strides = array<i32>} : memref<128x128xf32, #tpu.memory_space<vmem>>, vector<128x128xf32>,
    } else {
    }
    return
  }
  func.func @transform_0(%arg0: i32) -> i32 {
    %c0_i32 = arith.constant 0 : i32
    %c0_i32_0 = arith.constant 0 : i32
    return %c0_i32 : i32
  }
  func.func @transform_2(%arg0: i32) -> (i32, i32) {
    %c0_i32 = arith.constant 0 : i32
    %c0_i32_0 = arith.constant 0 : i32
    %c0_i32_1 = arith.constant 0 : i32
    return %c0_i32, %c0_i32_0 : i32, i32
  }
  func.func @transform_3(%arg0: i32) -> (i32, i32, i32) {
    %c0_i32 = arith.constant 0 : i32
    %c0_i32_0 = arith.constant 0 : i32
    %c0_i32_1 = arith.constant 0 : i32
    return %arg0, %c0_i32, %c0_i32_0 : i32, i32, i32
  }
  func.func @transform_4(%arg0: i32) -> (i32, i32) {
    %c0_i32 = arith.constant 0 : i32
    %c0_i32_0 = arith.constant 0 : i32
    %c0_i32_1 = arith.constant 0 : i32
    return %c0_i32, %c0_i32_0 : i32, i32
  }
  func.func @transform_5(%arg0: i32) -> (i32, i32) {
    %c0_i32 = arith.constant 0 : i32
    %c0_i32_0 = arith.constant 0 : i32
    %c0_i32_1 = arith.constant 0 : i32
    return %c0_i32, %c0_i32_0 : i32, i32
  }
  func.func @transform_6(%arg0: i32) -> (i32, i32) {
    %c0_i32 = arith.constant 0 : i32
    %c0_i32_0 = arith.constant 0 : i32
    %c0_i32_1 = arith.constant 0 : i32
    return %c0_i32, %c0_i32_0 : i32, i32
  }
}

</mosaic_0001>

<llo_original>
// kernel: tpu_custom_call.1
$region0: #{tpu_custom_call.1}
  #allocation0 [shape = 'u32[]', space=smem, size = 0x4, offset = 0x4, fixed_abs, tag = 'smem constant byte address 0x4 - core index']
  #allocation1 [shape = 'u32[144,128]{1,0:T(1,128)}', space=vmem, size = 0x12000, scoped, tag = 'internal scratch']
  #allocation2 [shape = 'bf16[128,128]{1,0:T(16,128)(2,1)}', space=vmem, size = 0x8000, scoped, tag = 'scratch operand']
  #allocation3 [shape = 'bf16[128,128]{1,0:T(16,128)(2,1)}', space=vmem, size = 0x8000, scoped, tag = 'scratch operand']
  #allocation4 [shape = 's32[1]{0}', space=sflag, size = 0x4, scoped, tag = 'scratch operand']
  #allocation14 [shape = 's32[]', space=sflag, size = 0x4, offset = 0, fixed_abs, tag = 'sflag constant byte address 0x0 - dummy sync flag']
  #allocation15 [shape = 's32[]', space=sflag, size = 0x4, offset = 0, fixed_abs, tag = 'sflag constant byte address 0x0 - dummy sync flag']
  #allocation16 [shape = 'u32[]', space=smem, size = 0x4, offset = 0x44, fixed_abs, tag = 'smem constant byte address 0x44 - assertion arg 0']
  #allocation17 [shape = 'u32[]', space=smem, size = 0x4, offset = 0x48, fixed_abs, tag = 'smem constant byte address 0x48 - assertion arg 1']
  %s0 = inlined_call_operand.hbm [shape: f32[3], index: 0, kind: input, shape index: {}]
  %s1 = inlined_call_operand.hbm [shape: bf16[128,128], index: 1, kind: input, shape index: {}]
  %s2 = inlined_call_operand.hbm [shape: f32[128,128], index: 2, kind: input, shape index: {}]
  %s3 = inlined_call_operand.hbm [shape: bf16[3,128,128], index: 3, kind: input, shape index: {}]
  %s4 = inlined_call_operand.hbm [shape: bf16[128,128], index: 4, kind: input, shape index: {}]
  %s5 = inlined_call_operand.vmem [shape: f32[1,128], index: 5, kind: input, shape index: {}]
  %s6 = inlined_call_operand.hbm [shape: f32[128,128], index: 6, kind: output, shape index: {}]
  %s7 = sld [smem:[#allocation0]]
  $region81: #{tpu_custom_call.1} parent=0
    _
  %s9 = ssub.s32 1, %s7
  %s10 = scalar_select 0, %s9, %s7
  $region1: #{tpu_custom_call.1} parent=0
    #allocation5 [shape = 'u8[512]{0}', space=smem, size = 0x200, scoped, tag = 'input window, operand 0, single buffered']
    #allocation6 [shape = 's32[2]{0}', space=sflag, size = 0x8, scoped, tag = 'scoped memory for tpu_custom_call.1']
    #allocation7 [shape = 's32[2]{0}', space=sflag, size = 0x8, scoped, tag = 'scoped memory for tpu_custom_call.1']
    #allocation8 [shape = 's32[2]{0}', space=sflag, size = 0x8, scoped, tag = 'scoped memory for tpu_custom_call.1']
    #allocation9 [shape = 'u8[65536]{0}', space=vmem, size = 0x10000, scoped, tag = 'input window, operand 2, single buffered']
    #allocation10 [shape = 'u8[65536]{0}', space=vmem, size = 0x10000, scoped, tag = 'input window, operand 3']
    #allocation11 [shape = 's32[2]{0}', space=sflag, size = 0x8, scoped, tag = 'scoped memory for tpu_custom_call.1']
    #allocation12 [shape = 'u8[32768]{0}', space=vmem, size = 0x8000, scoped, tag = 'input window, operand 4, single buffered']
    #allocation13 [shape = 'u8[65536]{0}', space=vmem, size = 0x10000, scoped, tag = 'output window, operand 0, single buffered']
    %11 = vsyncpa [#allocation8], 0
    %12 = vsyncpa [#allocation6], 0
    %13 = vsyncpa [#allocation11], 0
    %s14 = scalar_lea.sflag [#allocation11], 1
    %15 = vsyncpa %s14, 0
    %16 = vsyncpa [#allocation7], 0
    loop: start=0, step=1, limit=5
    $region2: #{tpu_custom_call.1} parent=1 // loop_pre_header
      _
    $region3: #{tpu_custom_call.1} parent=1 // loop_header
      %s18 = sphi 0, %s22
      %p19 = scmp.ge.s32.totalorder %s18, 5
      %s26 = sphi 0, %s26
      %s28 = sphi 0, %s26
      %s29 = sphi 0, %s28
      %s43 = sphi 0, %s29
      %s47 = sphi 0, %s47
      %s49 = sphi 0, %s47
      %s50 = sphi 0, %s49
      %s64 = sphi 0, %s50
      %s70 = sphi 0, %s72
      %s73 = sphi 0, %s70
      %s74 = sphi 0, %s73
      %s90 = sphi 0, %s74
      %s94 = sphi 0, %s94
      %s96 = sphi 0, %s94
      %s97 = sphi 0, %s96
      %s111 = sphi 0, %s97
      %s115 = sphi 0, %s115
      %s117 = sphi 0, %s115
      %s118 = sphi 0, %s117
      %s132 = sphi 0, %s118
      %s136 = sphi 0, %s136
      %s138 = sphi 0, %s136
      %s139 = sphi 0, %s138
      %s153 = sphi 0, %s139
    $region4: #{tpu_custom_call.1} parent=1 // loop_header_branch
      %21 = sbr.rel (%p19) target = $region8
    $region5: #{tpu_custom_call.1} parent=1 // loop_body
      %s23 = ssub.s32 %s18, 1
      %s24 = ssub.s32 %s18, 2
      %s25 = sadd.s32 %s18, 1
      %s27 = sadd.s32 %s26, 1
      %p30 = scmp.eq.s32.totalorder %s18, 2
      %p31 = scmp.ne.s32.totalorder %s26, %s28
      %p32 = scmp.eq.s32.totalorder %s18, 0
      %p33 = por %p31, %p32
      %p34 = scmp.ne.s32.totalorder %s26, %s28
      %p35 = scmp.eq.s32.totalorder %s23, 2
      %p36 = por %p34, %p35
      %p37 = scmp.ne.s32.totalorder %s28, %s29
      %p38 = scmp.eq.s32.totalorder %s23, 0
      %p39 = por %p37, %p38
      %p40 = scmp.ne.s32.totalorder %s28, %s29
      %p41 = scmp.eq.s32.totalorder %s24, 2
      %p42 = por %p40, %p41
      %p44 = scmp.ne.s32.totalorder %s29, %s43
      %p45 = scmp.eq.s32.totalorder %s24, 0
      %p46 = por %p44, %p45
      %s48 = sadd.s32 %s47, 1
      %p51 = scmp.eq.s32.totalorder %s18, 2
      %p52 = scmp.ne.s32.totalorder %s47, %s49
      %p53 = scmp.eq.s32.totalorder %s18, 0
      %p54 = por %p52, %p53
      %p55 = scmp.ne.s32.totalorder %s47, %s49
      %p56 = scmp.eq.s32.totalorder %s23, 2
      %p57 = por %p55, %p56
      %p58 = scmp.ne.s32.totalorder %s49, %s50
      %p59 = scmp.eq.s32.totalorder %s23, 0
      %p60 = por %p58, %p59
      %p61 = scmp.ne.s32.totalorder %s49, %s50
      %p62 = scmp.eq.s32.totalorder %s24, 2
      %p63 = por %p61, %p62
      %p65 = scmp.ne.s32.totalorder %s50, %s64
      %p66 = scmp.eq.s32.totalorder %s24, 0
      %p67 = por %p65, %p66
      %s68 = ssub.s32 %s18, %s25
      %p69 = scmp.eq.s32.totalorder %s68, 0
      %s71 = sadd.s32 %s70, 1
      %s72 = scalar_select %p69, %s70, %s71
      %p75 = pneg %p69
      %p76 = scmp.eq.s32.totalorder %s18, 2
      %p77 = por %p75, %p76
      %p78 = scmp.ne.s32.totalorder %s70, %s73
      %p79 = scmp.eq.s32.totalorder %s18, 0
      %p80 = por %p78, %p79
      %p81 = scmp.ne.s32.totalorder %s70, %s73
      %p82 = scmp.eq.s32.totalorder %s23, 2
      %p83 = por %p81, %p82
      %p84 = scmp.ne.s32.totalorder %s73, %s74
      %p85 = scmp.eq.s32.totalorder %s23, 0
      %p86 = por %p84, %p85
      %p87 = scmp.ne.s32.totalorder %s73, %s74
      %p88 = scmp.eq.s32.totalorder %s24, 2
      %p89 = por %p87, %p88
      %p91 = scmp.ne.s32.totalorder %s74, %s90
      %p92 = scmp.eq.s32.totalorder %s24, 0
      %p93 = por %p91, %p92
      %s95 = sadd.s32 %s94, 1
      %p98 = scmp.eq.s32.totalorder %s18, 2
      %p99 = scmp.ne.s32.totalorder %s94, %s96
      %p100 = scmp.eq.s32.totalorder %s18, 0
      %p101 = por %p99, %p100
      %p102 = scmp.ne.s32.totalorder %s94, %s96
      %p103 = scmp.eq.s32.totalorder %s23, 2
      %p104 = por %p102, %p103
      %p105 = scmp.ne.s32.totalorder %s96, %s97
      %p106 = scmp.eq.s32.totalorder %s23, 0
      %p107 = por %p105, %p106
      %p108 = scmp.ne.s32.totalorder %s96, %s97
      %p109 = scmp.eq.s32.totalorder %s24, 2
      %p110 = por %p108, %p109
      %p112 = scmp.ne.s32.totalorder %s97, %s111
      %p113 = scmp.eq.s32.totalorder %s24, 0
      %p114 = por %p112, %p113
      %s116 = sadd.s32 %s115, 1
      %p119 = scmp.eq.s32.totalorder %s18, 2
      %p120 = scmp.ne.s32.totalorder %s115, %s117
      %p121 = scmp.eq.s32.totalorder %s18, 0
      %p122 = por %p120, %p121
      %p123 = scmp.ne.s32.totalorder %s115, %s117
      %p124 = scmp.eq.s32.totalorder %s23, 2
      %p125 = por %p123, %p124
      %p126 = scmp.ne.s32.totalorder %s117, %s118
      %p127 = scmp.eq.s32.totalorder %s23, 0
      %p128 = por %p126, %p127
      %p129 = scmp.ne.s32.totalorder %s117, %s118
      %p130 = scmp.eq.s32.totalorder %s24, 2
      %p131 = por %p129, %p130
      %p133 = scmp.ne.s32.totalorder %s118, %s132
      %p134 = scmp.eq.s32.totalorder %s24, 0
      %p135 = por %p133, %p134
      %s137 = sadd.s32 %s136, 1
      %p140 = scmp.eq.s32.totalorder %s18, 2
      %p141 = scmp.ne.s32.totalorder %s136, %s138
      %p142 = scmp.eq.s32.totalorder %s18, 0
      %p143 = por %p141, %p142
      %p144 = scmp.ne.s32.totalorder %s136, %s138
      %p145 = scmp.eq.s32.totalorder %s23, 2
      %p146 = por %p144, %p145
      %p147 = scmp.ne.s32.totalorder %s138, %s139
      %p148 = scmp.eq.s32.totalorder %s23, 0
      %p149 = por %p147, %p148
      %p150 = scmp.ne.s32.totalorder %s138, %s139
      %p151 = scmp.eq.s32.totalorder %s24, 2
      %p152 = por %p150, %p151
      %p154 = scmp.ne.s32.totalorder %s139, %s153
      %p155 = scmp.eq.s32.totalorder %s24, 0
      %p156 = por %p154, %p155
      %p157 = scmp.le.s32.totalorder 1, %s18
      %p158 = scmp.lt.s32.totalorder %s18, 4
      %p159 = pnand %p157, %p158
      %p160 = pneg %p159
      // Predicated region
      $region9: #{tpu_custom_call.1} parent=5 // pred_check
        _
      $region10: #{tpu_custom_call.1} parent=5 // pred_check_branch
        %162 = sbr.rel (%p159) target = $region12
      $region11: #{tpu_custom_call.1} parent=5 // pred_region
        %s163 = ssub.s32 %s18, 1
        // Predicated region
        $region13: #{tpu_custom_call.1} parent=11 // pred_check
          %p164 = pneg %p39
        $region14: #{tpu_custom_call.1} parent=11 // pred_check_branch
          %166 = sbr.rel (%p164) target = $region16
        $region15: #{tpu_custom_call.1} parent=11 // pred_region
          %s168 = ssub.s32 16, 16
          %169 = vsyncadd [#allocation8], %s168
          %172 = dma.hbm_to_smem %s0, 16, [#allocation5], [#allocation8]
        $region16: #{tpu_custom_call.1} parent=11 // pred_fallthru
          _
        // Predicated region
        $region17: #{tpu_custom_call.1} parent=11 // pred_check
          %p173 = pneg %p60
        $region18: #{tpu_custom_call.1} parent=11 // pred_check_branch
          %175 = sbr.rel (%p173) target = $region20
        $region19: #{tpu_custom_call.1} parent=11 // pred_region
          %s177 = ssub.s32 2048, 2048
          %178 = vsyncadd [#allocation6], %s177
          %s179 = sshll.u32 [#allocation9], 4
          %s180 = int_to_ptr.vmem [resolvable:$true] %s179
          %185 = dma.hbm_to_vmem [thread:$0]  %s2, 2048, %s180, [#allocation6], 128, 128, 8
        $region20: #{tpu_custom_call.1} parent=11 // pred_fallthru
          _
        // Predicated region
        $region21: #{tpu_custom_call.1} parent=11 // pred_check
          %p186 = pneg %p107
        $region22: #{tpu_custom_call.1} parent=11 // pred_check_branch
          %188 = sbr.rel (%p186) target = $region24
        $region23: #{tpu_custom_call.1} parent=11 // pred_region
          %s190 = ssub.s32 1024, 1024
          %191 = vsyncadd [#allocation11], %s190
          %s192 = sshll.u32 [#allocation12], 4
          %s193 = int_to_ptr.vmem [resolvable:$true] %s192
          %198 = dma.hbm_to_vmem [thread:$0]  %s4, 1024, %s193, [#allocation11], 64, 64, 4
        $region24: #{tpu_custom_call.1} parent=11 // pred_fallthru
          _
        // Predicated region
        $region25: #{tpu_custom_call.1} parent=11 // pred_check
          %p199 = pneg %p128
        $region26: #{tpu_custom_call.1} parent=11 // pred_check_branch
          %201 = sbr.rel (%p199) target = $region28
        $region27: #{tpu_custom_call.1} parent=11 // pred_region
          _
        $region28: #{tpu_custom_call.1} parent=11 // pred_fallthru
          _
      $region12: #{tpu_custom_call.1} parent=5 // pred_fallthru
        _
      %p202 = scmp.lt.s32.totalorder %s18, 3
      // Predicated region
      $region29: #{tpu_custom_call.1} parent=5 // pred_check
        %p203 = pneg %p202
      $region30: #{tpu_custom_call.1} parent=5 // pred_check_branch
        %205 = sbr.rel (%p203) target = $region32
      $region31: #{tpu_custom_call.1} parent=5 // pred_region
        // Predicated region
        $region33: #{tpu_custom_call.1} parent=31 // pred_check
          %p206 = pneg %p80
        $region34: #{tpu_custom_call.1} parent=31 // pred_check_branch
          %208 = sbr.rel (%p206) target = $region36
        $region35: #{tpu_custom_call.1} parent=31 // pred_region
          %s209 = sand.u32 %s18, 1
          %s210 = scalar_lea.sflag [#allocation11], %s209
          %s211 = sand.u32 %s70, 1
          %s212 = smul.addr %s211, 64
          %s213 = scalar_lea.vmem [#allocation10], %s212
          %s215 = ssub.s32 1024, 1024
          %216 = vsyncadd %s210, %s215
          %s217 = smul.addr %s18, 16
          %s218 = smul.addr %s217, 64
          %s219 = scalar_lea.hbm %s3, %s218
          %s220 = sshll.u32 %s213, 4
          %s221 = int_to_ptr.vmem [resolvable:$true] %s220
          %226 = dma.hbm_to_vmem [thread:$0]  %s219, 1024, %s221, %s210, 64, 64, 4
        $region36: #{tpu_custom_call.1} parent=31 // pred_fallthru
          _
      $region32: #{tpu_custom_call.1} parent=5 // pred_fallthru
        _
      %p227 = scmp.le.s32.totalorder 1, %s18
      %p228 = scmp.lt.s32.totalorder %s18, 4
      %p229 = pnand %p227, %p228
      %p230 = pneg %p229
      // Predicated region
      $region37: #{tpu_custom_call.1} parent=5 // pred_check
        _
      $region38: #{tpu_custom_call.1} parent=5 // pred_check_branch
        %232 = sbr.rel (%p229) target = $region40
      $region39: #{tpu_custom_call.1} parent=5 // pred_region
        %s233 = ssub.s32 %s18, 1
        // Predicated region
        $region41: #{tpu_custom_call.1} parent=39 // pred_check
          %p234 = pneg %p39
        $region42: #{tpu_custom_call.1} parent=39 // pred_check_branch
          %236 = sbr.rel (%p234) target = $region44
        $region43: #{tpu_custom_call.1} parent=39 // pred_region
          %237 = dma.done [#allocation8], 16
        $region44: #{tpu_custom_call.1} parent=39 // pred_fallthru
          _
        // Predicated region
        $region45: #{tpu_custom_call.1} parent=39 // pred_check
          %p238 = pneg %p60
        $region46: #{tpu_custom_call.1} parent=39 // pred_check_branch
          %240 = sbr.rel (%p238) target = $region48
        $region47: #{tpu_custom_call.1} parent=39 // pred_region
          %241 = dma.done [#allocation6], 2048
        $region48: #{tpu_custom_call.1} parent=39 // pred_fallthru
          _
        %s242 = sand.u32 %s23, 1
        %s243 = scalar_lea.sflag [#allocation11], %s242
        %s244 = sand.u32 %s73, 1
        %s245 = smul.addr %s244, 64
        %s246 = scalar_lea.vmem [#allocation10], %s245
        // Predicated region
        $region49: #{tpu_custom_call.1} parent=39 // pred_check
          %p247 = pneg %p86
        $region50: #{tpu_custom_call.1} parent=39 // pred_check_branch
          %249 = sbr.rel (%p247) target = $region52
        $region51: #{tpu_custom_call.1} parent=39 // pred_region
          %250 = dma.done %s243, 1024
        $region52: #{tpu_custom_call.1} parent=39 // pred_fallthru
          _
        // Predicated region
        $region53: #{tpu_custom_call.1} parent=39 // pred_check
          %p251 = pneg %p107
        $region54: #{tpu_custom_call.1} parent=39 // pred_check_branch
          %253 = sbr.rel (%p251) target = $region56
        $region55: #{tpu_custom_call.1} parent=39 // pred_region
          %254 = dma.done [#allocation11], 1024
        $region56: #{tpu_custom_call.1} parent=39 // pred_fallthru
          _
        %255 = sfence
        %p256 = pneg %p39
        %p257 = pneg %p36
        %p258 = pneg %p60
        %p259 = pneg %p57
        %s260 = sand.u32 %s23, 1
        %s261 = scalar_lea.sflag [#allocation11], %s260
        %s262 = sand.u32 %s73, 1
        %s263 = smul.addr %s262, 64
        %s264 = scalar_lea.vmem [#allocation10], %s263
        %p265 = pneg %p86
        %p266 = pneg %p83
        %p267 = pneg %p107
        %p268 = pneg %p104
        %p269 = pneg %p128
        %p270 = pneg %p125
        %p271 = pneg %p149
        %p272 = pneg %p146
        %p274 = scmp.eq.s32.totalorder %s23, 0
        // Predicated region
        $region57: #{tpu_custom_call.1} parent=39 // pred_check
          %p275 = pneg %p274
        $region58: #{tpu_custom_call.1} parent=39 // pred_check_branch
          %277 = sbr.rel (%p275) target = $region60
        $region59: #{tpu_custom_call.1} parent=39 // pred_region
          // Predicated region
          $region61: #{tpu_custom_call.1} parent=59 // pred_check
            _
          $region62: #{tpu_custom_call.1} parent=59 // pred_check_branch
            %279 = sbr.rel target = $region64
          $region63: #{tpu_custom_call.1} parent=59 // pred_region
            %280 = sst [smem:[#allocation16]] [#allocation15]
            %281 = sst [smem:[#allocation17]] [#allocation14]
          $region64: #{tpu_custom_call.1} parent=59 // pred_fallthru
            _
          %283 = shalt.err (0)
          %s285 = sshll.u32 [#allocation2], 4
          %s286 = int_to_ptr.vmem [resolvable:$true] %s285
          %288 = dma.hbm_to_vmem [thread:$0]  %s1, 1024, %s286, [#allocation4]
          %v289 = vld [vmem:[#allocation9] sm:$0xff]
          %v290 = vld [vmem:[#allocation9 + $0x8] sm:$0xff]
          %v291 = vld [vmem:[#allocation9 + $0x10] sm:$0xff]
          %v292 = vld [vmem:[#allocation9 + $0x18] sm:$0xff]
          %v293 = vld [vmem:[#allocation9 + $0x20] sm:$0xff]
          %v294 = vld [vmem:[#allocation9 + $0x28] sm:$0xff]
          %v295 = vld [vmem:[#allocation9 + $0x30] sm:$0xff]
          %v296 = vld [vmem:[#allocation9 + $0x38] sm:$0xff]
          %v297 = vld [vmem:[#allocation9 + $0x40] sm:$0xff]
          %v298 = vld [vmem:[#allocation9 + $0x48] sm:$0xff]
          %v299 = vld [vmem:[#allocation9 + $0x50] sm:$0xff]
          %v300 = vld [vmem:[#allocation9 + $0x58] sm:$0xff]
          %v301 = vld [vmem:[#allocation9 + $0x60] sm:$0xff]
          %v302 = vld [vmem:[#allocation9 + $0x68] sm:$0xff]
          %v303 = vld [vmem:[#allocation9 + $0x70] sm:$0xff]
          %v304 = vld [vmem:[#allocation9 + $0x78] sm:$0xff]
          %v305 = vpack.c.bf16 %v290, %v289
          %v306 = vpack.c.bf16 %v292, %v291
          %v307 = vpack.c.bf16 %v294, %v293
          %v308 = vpack.c.bf16 %v296, %v295
          %v309 = vpack.c.bf16 %v298, %v297
          %v310 = vpack.c.bf16 %v300, %v299
          %v311 = vpack.c.bf16 %v302, %v301
          %v312 = vpack.c.bf16 %v304, %v303
          %313 = vst [vmem:[#allocation3] sm:$0xff] %v305
          %314 = vst [vmem:[#allocation3 + $0x8] sm:$0xff] %v306
          %315 = vst [vmem:[#allocation3 + $0x10] sm:$0xff] %v307
          %316 = vst [vmem:[#allocation3 + $0x18] sm:$0xff] %v308
          %317 = vst [vmem:[#allocation3 + $0x20] sm:$0xff] %v309
          %318 = vst [vmem:[#allocation3 + $0x28] sm:$0xff] %v310
          %319 = vst [vmem:[#allocation3 + $0x30] sm:$0xff] %v311
          %320 = vst [vmem:[#allocation3 + $0x38] sm:$0xff] %v312
          %s321 = smul.u32 4, 16
          %s322 = smul.u32 %s321, 1
          %s323 = sshll.u32 %s322, 4
          %324 = dma.done [#allocation4], %s323
        $region60: #{tpu_custom_call.1} parent=39 // pred_fallthru
          _
        %s325 = sld [smem:[#allocation5 + %s23]]
        %v326 = vld [vmem:[#allocation2] sm:$0xff]
        %v327 = vld [vmem:[#allocation2 + $0x8] sm:$0xff]
        %v328 = vld [vmem:[#allocation2 + $0x10] sm:$0xff]
        %v329 = vld [vmem:[#allocation2 + $0x18] sm:$0xff]
        %v330 = vld [vmem:[#allocation2 + $0x20] sm:$0xff]
        %v331 = vld [vmem:[#allocation2 + $0x28] sm:$0xff]
        %v332 = vld [vmem:[#allocation2 + $0x30] sm:$0xff]
        %v333 = vld [vmem:[#allocation2 + $0x38] sm:$0xff]
        %v334 = vld [vmem:[#allocation3] sm:$0xff]
        %v335 = vld [vmem:[#allocation3 + $0x8] sm:$0xff]
        %v336 = vld [vmem:[#allocation3 + $0x10] sm:$0xff]
        %v337 = vld [vmem:[#allocation3 + $0x18] sm:$0xff]
        %v338 = vld [vmem:[#allocation3 + $0x20] sm:$0xff]
        %v339 = vld [vmem:[#allocation3 + $0x28] sm:$0xff]
        %v340 = vld [vmem:[#allocation3 + $0x30] sm:$0xff]
        %v341 = vld [vmem:[#allocation3 + $0x38] sm:$0xff]
        %v342 = vld [vmem:[#allocation9] sm:$0xff]
        %v343 = vld [vmem:[#allocation9 + $0x8] sm:$0xff]
        %v344 = vld [vmem:[#allocation9 + $0x10] sm:$0xff]
        %v345 = vld [vmem:[#allocation9 + $0x18] sm:$0xff]
        %v346 = vld [vmem:[#allocation9 + $0x20] sm:$0xff]
        %v347 = vld [vmem:[#allocation9 + $0x28] sm:$0xff]
        %v348 = vld [vmem:[#allocation9 + $0x30] sm:$0xff]
        %v349 = vld [vmem:[#allocation9 + $0x38] sm:$0xff]
        %v350 = vld [vmem:[#allocation9 + $0x40] sm:$0xff]
        %v351 = vld [vmem:[#allocation9 + $0x48] sm:$0xff]
        %v352 = vld [vmem:[#allocation9 + $0x50] sm:$0xff]
        %v353 = vld [vmem:[#allocation9 + $0x58] sm:$0xff]
        %v354 = vld [vmem:[#allocation9 + $0x60] sm:$0xff]
        %v355 = vld [vmem:[#allocation9 + $0x68] sm:$0xff]
        %v356 = vld [vmem:[#allocation9 + $0x70] sm:$0xff]
        %v357 = vld [vmem:[#allocation9 + $0x78] sm:$0xff]
        %v358 = vmul.f32 %v342, 0.1
        %v359 = vmul.f32 %v343, 0.1
        %v360 = vmul.f32 %v344, 0.1
        %v361 = vmul.f32 %v345, 0.1
        %v362 = vmul.f32 %v346, 0.1
        %v363 = vmul.f32 %v347, 0.1
        %v364 = vmul.f32 %v348, 0.1
        %v365 = vmul.f32 %v349, 0.1
        %v366 = vmul.f32 %v350, 0.1
        %v367 = vmul.f32 %v351, 0.1
        %v368 = vmul.f32 %v352, 0.1
        %v369 = vmul.f32 %v353, 0.1
        %v370 = vmul.f32 %v354, 0.1
        %v371 = vmul.f32 %v355, 0.1
        %v372 = vmul.f32 %v356, 0.1
        %v373 = vmul.f32 %v357, 0.1
        %374 = vmatprep.subr.bf16.mxu0 0
        %375 = vmatpush1.bf16.msra.mxu0 %v334
        %376 = vmatprep.subr.bf16.mxu0 0
        %377 = vmatpush1.bf16.msra.mxu0 %v335
        %378 = vmatprep.subr.bf16.mxu0 0
        %379 = vmatpush1.bf16.msra.mxu0 %v336
        %380 = vmatprep.subr.bf16.mxu0 0
        %381 = vmatpush1.bf16.msra.mxu0 %v337
        %382 = vmatprep.subr.bf16.mxu0 0
        %383 = vmatpush1.bf16.msra.mxu0 %v338
        %384 = vmatprep.subr.bf16.mxu0 0
        %385 = vmatpush1.bf16.msra.mxu0 %v339
        %386 = vmatprep.subr.bf16.mxu0 0
        %387 = vmatpush1.bf16.msra.mxu0 %v340
        %388 = vmatprep.subr.bf16.mxu0 0
        %389 = vmatpush1.bf16.msra.mxu0 %v341
        %390 = vmatprep.subr.bf16.mxu0 0
        %391 = vmatpush1.bf16.msra.mxu0 0
        %392 = vmatprep.subr.bf16.mxu0 0
        %393 = vmatpush1.bf16.msra.mxu0 0
        %394 = vmatprep.subr.bf16.mxu0 0
        %395 = vmatpush1.bf16.msra.mxu0 0
        %396 = vmatprep.subr.bf16.mxu0 0
        %397 = vmatpush1.bf16.msra.mxu0 0
        %398 = vmatprep.subr.bf16.mxu0 0
        %399 = vmatpush1.bf16.msra.mxu0 0
        %400 = vmatprep.subr.bf16.mxu0 0
        %401 = vmatpush1.bf16.msra.mxu0 0
        %402 = vmatprep.subr.bf16.mxu0 0
        %403 = vmatpush1.bf16.msra.mxu0 0
        %404 = vmatprep.subr.bf16.mxu0 0
        %405 = vmatpush1.bf16.msra.mxu0 0
        %406 = vmatprep.mubr.bf16.mxu0 0
        %407 = vmatmul.mubr.bf16.gmra.mrb[0].mxu0 %v326
        %v408 = vpop.f32.mrb[0].mxu0
        %v409 = vadd.f32 %v358, %v408
        %v410 = vpop.f32.mrb[0].mxu0
        %v411 = vpop.f32.mrb[0].mxu0
        %v412 = vadd.f32 %v359, %v411
        %v413 = vpop.f32.mrb[0].mxu0
        %414 = vmatprep.mubr.bf16.mxu0 0
        %415 = vmatmul.mubr.bf16.gmra.mrb[0].mxu0 %v327
        %v416 = vpop.f32.mrb[0].mxu0
        %v417 = vadd.f32 %v360, %v416
        %v418 = vpop.f32.mrb[0].mxu0
        %v419 = vpop.f32.mrb[0].mxu0
        %v420 = vadd.f32 %v361, %v419
        %v421 = vpop.f32.mrb[0].mxu0
        %422 = vmatprep.mubr.bf16.mxu0 0
        %423 = vmatmul.mubr.bf16.gmra.mrb[0].mxu0 %v328
        %v424 = vpop.f32.mrb[0].mxu0
        %v425 = vadd.f32 %v362, %v424
        %v426 = vpop.f32.mrb[0].mxu0
        %v427 = vpop.f32.mrb[0].mxu0
        %v428 = vadd.f32 %v363, %v427
        %v429 = vpop.f32.mrb[0].mxu0
        %430 = vmatprep.mubr.bf16.mxu0 0
        %431 = vmatmul.mubr.bf16.gmra.mrb[0].mxu0 %v329
        %v432 = vpop.f32.mrb[0].mxu0
        %v433 = vadd.f32 %v364, %v432
        %v434 = vpop.f32.mrb[0].mxu0
        %v435 = vpop.f32.mrb[0].mxu0
        %v436 = vadd.f32 %v365, %v435
        %v437 = vpop.f32.mrb[0].mxu0
        %438 = vmatprep.mubr.bf16.mxu0 0
        %439 = vmatmul.mubr.bf16.gmra.mrb[0].mxu0 %v330
        %v440 = vpop.f32.mrb[0].mxu0
        %v441 = vadd.f32 %v366, %v440
        %v442 = vpop.f32.mrb[0].mxu0
        %v443 = vpop.f32.mrb[0].mxu0
        %v444 = vadd.f32 %v367, %v443
        %v445 = vpop.f32.mrb[0].mxu0
        %446 = vmatprep.mubr.bf16.mxu0 0
        %447 = vmatmul.mubr.bf16.gmra.mrb[0].mxu0 %v331
        %v448 = vpop.f32.mrb[0].mxu0
        %v449 = vadd.f32 %v368, %v448
        %v450 = vpop.f32.mrb[0].mxu0
        %v451 = vpop.f32.mrb[0].mxu0
        %v452 = vadd.f32 %v369, %v451
        %v453 = vpop.f32.mrb[0].mxu0
        %454 = vmatprep.mubr.bf16.mxu0 0
        %455 = vmatmul.mubr.bf16.gmra.mrb[0].mxu0 %v332
        %v456 = vpop.f32.mrb[0].mxu0
        %v457 = vadd.f32 %v370, %v456
        %v458 = vpop.f32.mrb[0].mxu0
        %v459 = vpop.f32.mrb[0].mxu0
        %v460 = vadd.f32 %v371, %v459
        %v461 = vpop.f32.mrb[0].mxu0
        %462 = vmatprep.mubr.bf16.mxu0 0
        %463 = vmatmul.mubr.bf16.gmra.mrb[0].mxu0 %v333
        %v464 = vpop.f32.mrb[0].mxu0
        %v465 = vadd.f32 %v372, %v464
        %v466 = vpop.f32.mrb[0].mxu0
        %v467 = vpop.f32.mrb[0].mxu0
        %v468 = vadd.f32 %v373, %v467
        %v469 = vpop.f32.mrb[0].mxu0
        %470 = vdwg.mxu0
        %v471 = vpack.c.bf16 %v412, %v409
        %v472 = vpack.c.bf16 %v420, %v417
        %v473 = vpack.c.bf16 %v428, %v425
        %v474 = vpack.c.bf16 %v436, %v433
        %v475 = vpack.c.bf16 %v444, %v441
        %v476 = vpack.c.bf16 %v452, %v449
        %v477 = vpack.c.bf16 %v460, %v457
        %v478 = vpack.c.bf16 %v468, %v465
        %v479 = vld [vmem:[%s246] sm:$0xf]
        %v480 = vld [vmem:[%s246 + $0x4] sm:$0xf]
        %v481 = vld [vmem:[%s246 + $0x8] sm:$0xf]
        %v482 = vld [vmem:[%s246 + $0xc] sm:$0xf]
        %v483 = vld [vmem:[%s246 + $0x10] sm:$0xf]
        %v484 = vld [vmem:[%s246 + $0x14] sm:$0xf]
        %v485 = vld [vmem:[%s246 + $0x18] sm:$0xf]
        %v486 = vld [vmem:[%s246 + $0x1c] sm:$0xf]
        %v487 = vld [vmem:[%s246 + $0x20] sm:$0xf]
        %v488 = vld [vmem:[%s246 + $0x24] sm:$0xf]
        %v489 = vld [vmem:[%s246 + $0x28] sm:$0xf]
        %v490 = vld [vmem:[%s246 + $0x2c] sm:$0xf]
        %v491 = vld [vmem:[%s246 + $0x30] sm:$0xf]
        %v492 = vld [vmem:[%s246 + $0x34] sm:$0xf]
        %v493 = vld [vmem:[%s246 + $0x38] sm:$0xf]
        %v494 = vld [vmem:[%s246 + $0x3c] sm:$0xf]
        %v495 = vstv %s325
        %v496 = vmul.f32 %v495, %v409
        %v497 = vmul.f32 %v495, %v412
        %v498 = vmul.f32 %v495, %v417
        %v499 = vmul.f32 %v495, %v420
        %v500 = vmul.f32 %v495, %v425
        %v501 = vmul.f32 %v495, %v428
        %v502 = vmul.f32 %v495, %v433
        %v503 = vmul.f32 %v495, %v436
        %v504 = vmul.f32 %v495, %v441
        %v505 = vmul.f32 %v495, %v444
        %v506 = vmul.f32 %v495, %v449
        %v507 = vmul.f32 %v495, %v452
        %v508 = vmul.f32 %v495, %v457
        %v509 = vmul.f32 %v495, %v460
        %v510 = vmul.f32 %v495, %v465
        %v511 = vmul.f32 %v495, %v468
        %v528 = vunpack.c.l.b16 %v479
        %v529 = vunpack.c.l.b16 %v480
        %v530 = vunpack.c.l.b16 %v481
        %v531 = vunpack.c.l.b16 %v482
        %v532 = vunpack.c.l.b16 %v483
        %v533 = vunpack.c.l.b16 %v484
        %v534 = vunpack.c.l.b16 %v485
        %v535 = vunpack.c.l.b16 %v486
        %v536 = vunpack.c.l.b16 %v487
        %v537 = vunpack.c.l.b16 %v488
        %v538 = vunpack.c.l.b16 %v489
        %v539 = vunpack.c.l.b16 %v490
        %v540 = vunpack.c.l.b16 %v491
        %v541 = vunpack.c.l.b16 %v492
        %v542 = vunpack.c.l.b16 %v493
        %v543 = vunpack.c.l.b16 %v494
        %v544 = vpack.c.b16 %v529, %v528
        %v545 = vpack.c.b16 %v531, %v530
        %v546 = vpack.c.b16 %v533, %v532
        %v547 = vpack.c.b16 %v535, %v534
        %v548 = vpack.c.b16 %v537, %v536
        %v549 = vpack.c.b16 %v539, %v538
        %v550 = vpack.c.b16 %v541, %v540
        %v551 = vpack.c.b16 %v543, %v542
        %560 = vmatprep.subr.bf16.mxu0 0
        %561 = vmatpush1.bf16.msra.mxu0 %v544
        %562 = vmatprep.subr.bf16.mxu0 0
        %563 = vmatpush1.bf16.msra.mxu0 %v545
        %564 = vmatprep.subr.bf16.mxu0 0
        %565 = vmatpush1.bf16.msra.mxu0 %v546
        %566 = vmatprep.subr.bf16.mxu0 0
        %567 = vmatpush1.bf16.msra.mxu0 %v547
        %568 = vmatprep.subr.bf16.mxu0 0
        %569 = vmatpush1.bf16.msra.mxu0 %v548
        %570 = vmatprep.subr.bf16.mxu0 0
        %571 = vmatpush1.bf16.msra.mxu0 %v549
        %572 = vmatprep.subr.bf16.mxu0 0
        %573 = vmatpush1.bf16.msra.mxu0 %v550
        %574 = vmatprep.subr.bf16.mxu0 0
        %575 = vmatpush1.bf16.msra.mxu0 %v551
        %576 = vmatprep.subr.bf16.mxu0 0
        %577 = vmatpush1.bf16.msra.mxu0 0
        %578 = vmatprep.subr.bf16.mxu0 0
        %579 = vmatpush1.bf16.msra.mxu0 0
        %580 = vmatprep.subr.bf16.mxu0 0
        %581 = vmatpush1.bf16.msra.mxu0 0
        %582 = vmatprep.subr.bf16.mxu0 0
        %583 = vmatpush1.bf16.msra.mxu0 0
        %584 = vmatprep.subr.bf16.mxu0 0
        %585 = vmatpush1.bf16.msra.mxu0 0
        %586 = vmatprep.subr.bf16.mxu0 0
        %587 = vmatpush1.bf16.msra.mxu0 0
        %588 = vmatprep.subr.bf16.mxu0 0
        %589 = vmatpush1.bf16.msra.mxu0 0
        %590 = vmatprep.subr.bf16.mxu0 0
        %591 = vmatpush1.bf16.msra.mxu0 0
        %592 = vmatprep.mubr.bf16.mxu0 0
        %593 = vmatmul.mubr.bf16.gmra.mrb[0].mxu0 %v471
        %v594 = vpop.f32.mrb[0].mxu0
        %v595 = vadd.f32 %v496, %v594
        %v596 = vpop.f32.mrb[0].mxu0
        %v597 = vpop.f32.mrb[0].mxu0
        %v598 = vadd.f32 %v497, %v597
        %v599 = vpop.f32.mrb[0].mxu0
        %600 = vmatprep.mubr.bf16.mxu0 0
        %601 = vmatmul.mubr.bf16.gmra.mrb[0].mxu0 %v472
        %v602 = vpop.f32.mrb[0].mxu0
        %v603 = vadd.f32 %v498, %v602
        %v604 = vpop.f32.mrb[0].mxu0
        %v605 = vpop.f32.mrb[0].mxu0
        %v606 = vadd.f32 %v499, %v605
        %v607 = vpop.f32.mrb[0].mxu0
        %608 = vmatprep.mubr.bf16.mxu0 0
        %609 = vmatmul.mubr.bf16.gmra.mrb[0].mxu0 %v473
        %v610 = vpop.f32.mrb[0].mxu0
        %v611 = vadd.f32 %v500, %v610
        %v612 = vpop.f32.mrb[0].mxu0
        %v613 = vpop.f32.mrb[0].mxu0
        %v614 = vadd.f32 %v501, %v613
        %v615 = vpop.f32.mrb[0].mxu0
        %616 = vmatprep.mubr.bf16.mxu0 0
        %617 = vmatmul.mubr.bf16.gmra.mrb[0].mxu0 %v474
        %v618 = vpop.f32.mrb[0].mxu0
        %v619 = vadd.f32 %v502, %v618
        %v620 = vpop.f32.mrb[0].mxu0
        %v621 = vpop.f32.mrb[0].mxu0
        %v622 = vadd.f32 %v503, %v621
        %v623 = vpop.f32.mrb[0].mxu0
        %624 = vmatprep.mubr.bf16.mxu0 0
        %625 = vmatmul.mubr.bf16.gmra.mrb[0].mxu0 %v475
        %v626 = vpop.f32.mrb[0].mxu0
        %v627 = vadd.f32 %v504, %v626
        %v628 = vpop.f32.mrb[0].mxu0
        %v629 = vpop.f32.mrb[0].mxu0
        %v630 = vadd.f32 %v505, %v629
        %v631 = vpop.f32.mrb[0].mxu0
        %632 = vmatprep.mubr.bf16.mxu0 0
        %633 = vmatmul.mubr.bf16.gmra.mrb[0].mxu0 %v476
        %v634 = vpop.f32.mrb[0].mxu0
        %v635 = vadd.f32 %v506, %v634
        %v636 = vpop.f32.mrb[0].mxu0
        %v637 = vpop.f32.mrb[0].mxu0
        %v638 = vadd.f32 %v507, %v637
        %v639 = vpop.f32.mrb[0].mxu0
        %640 = vmatprep.mubr.bf16.mxu0 0
        %641 = vmatmul.mubr.bf16.gmra.mrb[0].mxu0 %v477
        %v642 = vpop.f32.mrb[0].mxu0
        %v643 = vadd.f32 %v508, %v642
        %v644 = vpop.f32.mrb[0].mxu0
        %v645 = vpop.f32.mrb[0].mxu0
        %v646 = vadd.f32 %v509, %v645
        %v647 = vpop.f32.mrb[0].mxu0
        %648 = vmatprep.mubr.bf16.mxu0 0
        %649 = vmatmul.mubr.bf16.gmra.mrb[0].mxu0 %v478
        %v650 = vpop.f32.mrb[0].mxu0
        %v651 = vadd.f32 %v510, %v650
        %v652 = vpop.f32.mrb[0].mxu0
        %v653 = vpop.f32.mrb[0].mxu0
        %v654 = vadd.f32 %v511, %v653
        %v655 = vpop.f32.mrb[0].mxu0
        %656 = vdwg.mxu0
        %v657 = vmax.f32 %v595, 0.0
        %v658 = vmax.f32 %v598, 0.0
        %v659 = vmax.f32 %v603, 0.0
        %v660 = vmax.f32 %v606, 0.0
        %v661 = vmax.f32 %v611, 0.0
        %v662 = vmax.f32 %v614, 0.0
        %v663 = vmax.f32 %v619, 0.0
        %v664 = vmax.f32 %v622, 0.0
        %v665 = vmax.f32 %v627, 0.0
        %v666 = vmax.f32 %v630, 0.0
        %v667 = vmax.f32 %v635, 0.0
        %v668 = vmax.f32 %v638, 0.0
        %v669 = vmax.f32 %v643, 0.0
        %v670 = vmax.f32 %v646, 0.0
        %v671 = vmax.f32 %v651, 0.0
        %v672 = vmax.f32 %v654, 0.0
        %v673 = vpack.c.bf16 %v658, %v657
        %v674 = vpack.c.bf16 %v660, %v659
        %v675 = vpack.c.bf16 %v662, %v661
        %v676 = vpack.c.bf16 %v664, %v663
        %v677 = vpack.c.bf16 %v666, %v665
        %v678 = vpack.c.bf16 %v668, %v667
        %v679 = vpack.c.bf16 %v670, %v669
        %v680 = vpack.c.bf16 %v672, %v671
        %681 = vst [vmem:[#allocation3] sm:$0xff] %v673
        %682 = vst [vmem:[#allocation3 + $0x8] sm:$0xff] %v674
        %683 = vst [vmem:[#allocation3 + $0x10] sm:$0xff] %v675
        %684 = vst [vmem:[#allocation3 + $0x18] sm:$0xff] %v676
        %685 = vst [vmem:[#allocation3 + $0x20] sm:$0xff] %v677
        %686 = vst [vmem:[#allocation3 + $0x28] sm:$0xff] %v678
        %687 = vst [vmem:[#allocation3 + $0x30] sm:$0xff] %v679
        %688 = vst [vmem:[#allocation3 + $0x38] sm:$0xff] %v680
        %p689 = scmp.eq.s32.totalorder %s23, 2
        // Predicated region
        $region65: #{tpu_custom_call.1} parent=39 // pred_check
          %p690 = pneg %p689
        $region66: #{tpu_custom_call.1} parent=39 // pred_check_branch
          %692 = sbr.rel (%p690) target = $region68
        $region67: #{tpu_custom_call.1} parent=39 // pred_region
          %v693 = vld [vmem:[#allocation12] sm:$0xf]
          %v694 = vld [vmem:[#allocation12 + $0x4] sm:$0xf]
          %v695 = vld [vmem:[#allocation12 + $0x8] sm:$0xf]
          %v696 = vld [vmem:[#allocation12 + $0xc] sm:$0xf]
          %v697 = vld [vmem:[#allocation12 + $0x10] sm:$0xf]
          %v698 = vld [vmem:[#allocation12 + $0x14] sm:$0xf]
          %v699 = vld [vmem:[#allocation12 + $0x18] sm:$0xf]
          %v700 = vld [vmem:[#allocation12 + $0x1c] sm:$0xf]
          %v701 = vld [vmem:[#allocation12 + $0x20] sm:$0xf]
          %v702 = vld [vmem:[#allocation12 + $0x24] sm:$0xf]
          %v703 = vld [vmem:[#allocation12 + $0x28] sm:$0xf]
          %v704 = vld [vmem:[#allocation12 + $0x2c] sm:$0xf]
          %v705 = vld [vmem:[#allocation12 + $0x30] sm:$0xf]
          %v706 = vld [vmem:[#allocation12 + $0x34] sm:$0xf]
          %v707 = vld [vmem:[#allocation12 + $0x38] sm:$0xf]
          %v708 = vld [vmem:[#allocation12 + $0x3c] sm:$0xf]
          %v709 = vld [vmem:[%s5] sm:$0x1]
          %v711 = vlaneseq
          %v712 = vshrl.u32 %v711, 7
          %v713 = vsub.s32 0, %v712
          %v714 = vrot.slane %v709, %v713
          %v732 = vunpack.c.l.b16 %v693
          %v733 = vunpack.c.l.b16 %v694
          %v734 = vunpack.c.l.b16 %v695
          %v735 = vunpack.c.l.b16 %v696
          %v736 = vunpack.c.l.b16 %v697
          %v737 = vunpack.c.l.b16 %v698
          %v738 = vunpack.c.l.b16 %v699
          %v739 = vunpack.c.l.b16 %v700
          %v740 = vunpack.c.l.b16 %v701
          %v741 = vunpack.c.l.b16 %v702
          %v742 = vunpack.c.l.b16 %v703
          %v743 = vunpack.c.l.b16 %v704
          %v744 = vunpack.c.l.b16 %v705
          %v745 = vunpack.c.l.b16 %v706
          %v746 = vunpack.c.l.b16 %v707
          %v747 = vunpack.c.l.b16 %v708
          %v748 = vpack.c.b16 %v733, %v732
          %v749 = vpack.c.b16 %v735, %v734
          %v750 = vpack.c.b16 %v737, %v736
          %v751 = vpack.c.b16 %v739, %v738
          %v752 = vpack.c.b16 %v741, %v740
          %v753 = vpack.c.b16 %v743, %v742
          %v754 = vpack.c.b16 %v745, %v744
          %v755 = vpack.c.b16 %v747, %v746
          %764 = vmatprep.subr.bf16.mxu0 0
          %765 = vmatpush1.bf16.msra.mxu0 %v748
          %766 = vmatprep.subr.bf16.mxu0 0
          %767 = vmatpush1.bf16.msra.mxu0 %v749
          %768 = vmatprep.subr.bf16.mxu0 0
          %769 = vmatpush1.bf16.msra.mxu0 %v750
          %770 = vmatprep.subr.bf16.mxu0 0
          %771 = vmatpush1.bf16.msra.mxu0 %v751
          %772 = vmatprep.subr.bf16.mxu0 0
          %773 = vmatpush1.bf16.msra.mxu0 %v752
          %774 = vmatprep.subr.bf16.mxu0 0
          %775 = vmatpush1.bf16.msra.mxu0 %v753
          %776 = vmatprep.subr.bf16.mxu0 0
          %777 = vmatpush1.bf16.msra.mxu0 %v754
          %778 = vmatprep.subr.bf16.mxu0 0
          %779 = vmatpush1.bf16.msra.mxu0 %v755
          %780 = vmatprep.subr.bf16.mxu0 0
          %781 = vmatpush1.bf16.msra.mxu0 0
          %782 = vmatprep.subr.bf16.mxu0 0
          %783 = vmatpush1.bf16.msra.mxu0 0
          %784 = vmatprep.subr.bf16.mxu0 0
          %785 = vmatpush1.bf16.msra.mxu0 0
          %786 = vmatprep.subr.bf16.mxu0 0
          %787 = vmatpush1.bf16.msra.mxu0 0
          %788 = vmatprep.subr.bf16.mxu0 0
          %789 = vmatpush1.bf16.msra.mxu0 0
          %790 = vmatprep.subr.bf16.mxu0 0
          %791 = vmatpush1.bf16.msra.mxu0 0
          %792 = vmatprep.subr.bf16.mxu0 0
          %793 = vmatpush1.bf16.msra.mxu0 0
          %794 = vmatprep.subr.bf16.mxu0 0
          %795 = vmatpush1.bf16.msra.mxu0 0
          %796 = vmatprep.mubr.bf16.mxu0 0
          %797 = vmatmul.mubr.bf16.gmra.mrb[0].mxu0 %v673
          %v798 = vpop.f32.mrb[0].mxu0
          %v799 = vadd.f32 %v714, %v798
          %v800 = vpop.f32.mrb[0].mxu0
          %v801 = vpop.f32.mrb[0].mxu0
          %v802 = vadd.f32 %v714, %v801
          %v803 = vpop.f32.mrb[0].mxu0
          %804 = vmatprep.mubr.bf16.mxu0 0
          %805 = vmatmul.mubr.bf16.gmra.mrb[0].mxu0 %v674
          %v806 = vpop.f32.mrb[0].mxu0
          %v807 = vadd.f32 %v714, %v806
          %v808 = vpop.f32.mrb[0].mxu0
          %v809 = vpop.f32.mrb[0].mxu0
          %v810 = vadd.f32 %v714, %v809
          %v811 = vpop.f32.mrb[0].mxu0
          %812 = vmatprep.mubr.bf16.mxu0 0
          %813 = vmatmul.mubr.bf16.gmra.mrb[0].mxu0 %v675
          %v814 = vpop.f32.mrb[0].mxu0
          %v815 = vadd.f32 %v714, %v814
          %v816 = vpop.f32.mrb[0].mxu0
          %v817 = vpop.f32.mrb[0].mxu0
          %v818 = vadd.f32 %v714, %v817
          %v819 = vpop.f32.mrb[0].mxu0
          %820 = vmatprep.mubr.bf16.mxu0 0
          %821 = vmatmul.mubr.bf16.gmra.mrb[0].mxu0 %v676
          %v822 = vpop.f32.mrb[0].mxu0
          %v823 = vadd.f32 %v714, %v822
          %v824 = vpop.f32.mrb[0].mxu0
          %v825 = vpop.f32.mrb[0].mxu0
          %v826 = vadd.f32 %v714, %v825
          %v827 = vpop.f32.mrb[0].mxu0
          %828 = vmatprep.mubr.bf16.mxu0 0
          %829 = vmatmul.mubr.bf16.gmra.mrb[0].mxu0 %v677
          %v830 = vpop.f32.mrb[0].mxu0
          %v831 = vadd.f32 %v714, %v830
          %v832 = vpop.f32.mrb[0].mxu0
          %v833 = vpop.f32.mrb[0].mxu0
          %v834 = vadd.f32 %v714, %v833
          %v835 = vpop.f32.mrb[0].mxu0
          %836 = vmatprep.mubr.bf16.mxu0 0
          %837 = vmatmul.mubr.bf16.gmra.mrb[0].mxu0 %v678
          %v838 = vpop.f32.mrb[0].mxu0
          %v839 = vadd.f32 %v714, %v838
          %v840 = vpop.f32.mrb[0].mxu0
          %v841 = vpop.f32.mrb[0].mxu0
          %v842 = vadd.f32 %v714, %v841
          %v843 = vpop.f32.mrb[0].mxu0
          %844 = vmatprep.mubr.bf16.mxu0 0
          %845 = vmatmul.mubr.bf16.gmra.mrb[0].mxu0 %v679
          %v846 = vpop.f32.mrb[0].mxu0
          %v847 = vadd.f32 %v714, %v846
          %v848 = vpop.f32.mrb[0].mxu0
          %v849 = vpop.f32.mrb[0].mxu0
          %v850 = vadd.f32 %v714, %v849
          %v851 = vpop.f32.mrb[0].mxu0
          %852 = vmatprep.mubr.bf16.mxu0 0
          %853 = vmatmul.mubr.bf16.gmra.mrb[0].mxu0 %v680
          %v854 = vpop.f32.mrb[0].mxu0
          %v855 = vadd.f32 %v714, %v854
          %v856 = vpop.f32.mrb[0].mxu0
          %v857 = vpop.f32.mrb[0].mxu0
          %v858 = vadd.f32 %v714, %v857
          %v859 = vpop.f32.mrb[0].mxu0
          %860 = vdwg.mxu0
          %861 = vst [vmem:[#allocation13] sm:$0xff] %v799
          %862 = vst [vmem:[#allocation13 + $0x8] sm:$0xff] %v802
          %863 = vst [vmem:[#allocation13 + $0x10] sm:$0xff] %v807
          %864 = vst [vmem:[#allocation13 + $0x18] sm:$0xff] %v810
          %865 = vst [vmem:[#allocation13 + $0x20] sm:$0xff] %v815
          %866 = vst [vmem:[#allocation13 + $0x28] sm:$0xff] %v818
          %867 = vst [vmem:[#allocation13 + $0x30] sm:$0xff] %v823
          %868 = vst [vmem:[#allocation13 + $0x38] sm:$0xff] %v826
          %869 = vst [vmem:[#allocation13 + $0x40] sm:$0xff] %v831
          %870 = vst [vmem:[#allocation13 + $0x48] sm:$0xff] %v834
          %871 = vst [vmem:[#allocation13 + $0x50] sm:$0xff] %v839
          %872 = vst [vmem:[#allocation13 + $0x58] sm:$0xff] %v842
          %873 = vst [vmem:[#allocation13 + $0x60] sm:$0xff] %v847
          %874 = vst [vmem:[#allocation13 + $0x68] sm:$0xff] %v850
          %875 = vst [vmem:[#allocation13 + $0x70] sm:$0xff] %v855
          %876 = vst [vmem:[#allocation13 + $0x78] sm:$0xff] %v858
        $region68: #{tpu_custom_call.1} parent=39 // pred_fallthru
          _
        // Predicated region
        $region69: #{tpu_custom_call.1} parent=39 // pred_check
          %p877 = pneg %p146
        $region70: #{tpu_custom_call.1} parent=39 // pred_check_branch
          %879 = sbr.rel (%p877) target = $region72
        $region71: #{tpu_custom_call.1} parent=39 // pred_region
          %s881 = ssub.s32 2048, 2048
          %882 = vsyncadd [#allocation7], %s881
          %s883 = sshll.u32 [#allocation13], 4
          %s884 = int_to_ptr.vmem [resolvable:$true] %s883
          %889 = dma.vmem_to_hbm [thread:$0]  %s884, 2048, %s6, [#allocation7], 128, 128, 8
        $region72: #{tpu_custom_call.1} parent=39 // pred_fallthru
          _
        // Predicated region
        $region73: #{tpu_custom_call.1} parent=39 // pred_check
          %p890 = pneg %p146
        $region74: #{tpu_custom_call.1} parent=39 // pred_check_branch
          %892 = sbr.rel (%p890) target = $region76
        $region75: #{tpu_custom_call.1} parent=39 // pred_region
          %893 = dma.done [#allocation7], 2048
        $region76: #{tpu_custom_call.1} parent=39 // pred_fallthru
          _
      $region40: #{tpu_custom_call.1} parent=5 // pred_fallthru
        _
      %p894 = scmp.le.s32.totalorder 2, %s18
      // Predicated region
      $region77: #{tpu_custom_call.1} parent=5 // pred_check
        %p895 = pneg %p894
      $region78: #{tpu_custom_call.1} parent=5 // pred_check_branch
        %897 = sbr.rel (%p895) target = $region80
      $region79: #{tpu_custom_call.1} parent=5 // pred_region
        %s898 = ssub.s32 %s18, 2
      $region80: #{tpu_custom_call.1} parent=5 // pred_fallthru
        _
    $region6: #{tpu_custom_call.1} parent=1 // loop_footer
      %s22 = sadd.s32 1, %s18
    $region7: #{tpu_custom_call.1} parent=1 // loop_footer_branch
      %17 = sbr.rel target = $region3
    $region8: #{tpu_custom_call.1} parent=1 // loop_exit
      _
    %899 = vsyncpa [#allocation6], 1
    %s900 = scalar_lea.sflag [#allocation6], 1
    %901 = vsyncpa %s900, 1
    %902 = vsyncpa [#allocation11], 1
    %s903 = scalar_lea.sflag [#allocation11], 1
    %904 = vsyncpa %s903, 1
    %905 = vsyncpa [#allocation7], 1
    %s906 = scalar_lea.sflag [#allocation7], 1
    %907 = vsyncpa %s906, 1
    %908 = vsyncpa [#allocation8], 1
    %s909 = scalar_lea.sflag [#allocation8], 1
    %910 = vsyncpa %s909, 1
  %911 = vsyncmov [#allocation4]
  %s912 = vpop.sfrf %911
  %p913 = scmp.eq.s32.totalorder %s912, 0
  %p914 = pneg %p913
  %916 = shalt.err (%p914)

</llo_original>
